<compile_context>
chip_gen: v5e
topology: v5e:2x2
jax: 0.10.0
libtpu: 0.0.40
codegen_flags: <defaults>
</compile_context>

<pallas_src>
import functools

import jax
import jax.numpy as jnp
from jax import lax
from jax.experimental import pallas as pl
from jax.experimental.pallas import tpu as pltpu


def _round_up(x, m):
    return (x + m - 1) // m * m


def _time_aware_embedding_kernel(idhr_ref,    # (T_BLK, 2) int32, VMEM: [:,0]=item id, [:,1]=hour
                                 table_ref,   # (num_items + num_times, D) f32, VMEM-resident
                                 out_ref,     # (T_BLK, D) f32, VMEM
                                 *, num_items):
    """out[t, :] = table[id[t], :] + table[num_items + hour[t], :] (fused one-hot gather)."""
    t_blk = out_ref.shape[0]
    k_total = table_ref.shape[0]

    idhr = idhr_ref[...]                      # (T_BLK, 2)
    ids = idhr[:, 0:1]                        # (T_BLK, 1) item row
    hrs = idhr[:, 1:2] + num_items            # (T_BLK, 1) time row, shifted into table

    # Combined one-hot: exactly two 1s per row -> one MXU pass yields the sum
    # of both embedding rows. Out-of-range ids give an all-zero row (no OOB read).
    iota = lax.broadcasted_iota(jnp.int32, (t_blk, k_total), 1)
    onehot = ((iota == ids) | (iota == hrs)).astype(table_ref.dtype)

    # HIGHEST precision keeps the f32 table operand exact in the MXU (faithful
    # gather); the extra passes hide under the HBM output writeback.
    out_ref[...] = jnp.dot(
        onehot, table_ref[...],
        preferred_element_type=jnp.float32,
        precision=lax.Precision.HIGHEST,
    ).astype(out_ref.dtype)


def time_aware_embedding(item_ids, hour_of_day, item_table, time_table,
                         *, token_block=512):
    """Pallas wrapper. item_ids/hour_of_day: [B, S] int. Returns [B, S, D] f32."""
    B, S = item_ids.shape
    num_items, D = item_table.shape
    num_times, Dt = time_table.shape
    assert D == Dt, "elementwise add requires embedding_dim == time_dim"

    n_tokens = B * S
    # Keep blocks large (lane-dense writeback) but don't pad a tiny problem to 512.
    token_block = max(8, min(token_block, _round_up(n_tokens, 8)))
    n_blocks = pl.cdiv(n_tokens, token_block)
    n_pad = n_blocks * token_block

    # Pack ids and hours into one (n_pad, 2) int32 array -> one DMA per grid step.
    # Pad rows use id 0 / hour 0 (harmless; sliced off below).
    idhr = jnp.zeros((n_pad, 2), jnp.int32)
    idhr = idhr.at[:n_tokens, 0].set(item_ids.reshape(n_tokens).astype(jnp.int32))
    idhr = idhr.at[:n_tokens, 1].set(hour_of_day.reshape(n_tokens).astype(jnp.int32))

    # Fuse the two tables into one (num_items + num_times, D) table.
    table = jnp.concatenate(
        [item_table.astype(jnp.float32), time_table.astype(jnp.float32)], axis=0)
    k_total = num_items + num_times

    # ---- VMEM budget (corrected accounting) -----------------------------------
    lane = 128
    table_vmem = 2 * _round_up(k_total, 8) * D * 4          # resident table, 2 pipeline bufs
    idhr_vmem = 2 * token_block * lane * 4                   # (T,2) i32 pads to 128 lanes, x2 bufs
    out_vmem = 2 * token_block * D * 4                       # output block, x2 bufs
    scratch_vmem = 2 * token_block * _round_up(k_total, lane) * 4  # iota + one-hot temporaries
    needed = table_vmem + idhr_vmem + out_vmem + scratch_vmem + (2 << 20)

    try:  # generation-aware cap: ~48 MiB on v7x (64 MiB VMEM), ~96 MiB on v5e/v6e (128 MiB)
        vmem_cap = int(pltpu.get_tpu_info().vmem_capacity_bytes)
    except Exception:  # pragma: no cover - conservative fallback
        vmem_cap = 64 << 20
    vmem_limit = int(min(max(needed, 32 << 20), vmem_cap * 3 // 4))

    kernel = functools.partial(_time_aware_embedding_kernel, num_items=num_items)

    out_flat = pl.pallas_call(
        kernel,
        out_shape=jax.ShapeDtypeStruct((n_pad, D), jnp.float32),
        grid=(n_blocks,),
        in_specs=[
            pl.BlockSpec((token_block, 2), lambda i: (i, 0)),   # packed ids+hours block
            pl.BlockSpec((k_total, D), lambda i: (0, 0)),       # fused table (VMEM-resident)
        ],
        out_specs=pl.BlockSpec((token_block, D), lambda i: (i, 0)),
        compiler_params=pltpu.CompilerParams(
            dimension_semantics=("parallel",),
            vmem_limit_bytes=vmem_limit,
        ),
    )(idhr, table)

    return out_flat[:n_tokens].reshape(B, S, D)


if __name__ == "__main__":
    # Small, deterministic configuration.
    num_items = 64
    embedding_dim = 128   # = time_dim so the PyTorch add is a plain elementwise add
    time_dim = 128
    num_time_slots = 24 * 7  # 168
    B, S = 2, 8

    key = jax.random.PRNGKey(0)
    k_item, k_time, k_ids, k_hrs = jax.random.split(key, 4)

    # nn.Embedding default init: N(0, 1).
    item_table = jax.random.normal(k_item, (num_items, embedding_dim), dtype=jnp.float32)
    time_table = jax.random.normal(k_time, (num_time_slots, time_dim), dtype=jnp.float32)

    item_ids = jax.random.randint(k_ids, (B, S), 0, num_items, dtype=jnp.int32)
    hour_of_day = jax.random.randint(k_hrs, (B, S), 0, num_time_slots, dtype=jnp.int32)

    out = time_aware_embedding(item_ids, hour_of_day, item_table, time_table)
    out = jax.block_until_ready(out)

    # Pure-JAX reference check (same semantics as the PyTorch forward).
    ref = item_table[item_ids] + time_table[hour_of_day]
    assert out.shape == (B, S, embedding_dim)
    assert jnp.allclose(out, ref, atol=1e-5), "mismatch vs reference"

    print("KERNEL_OK")
</pallas_src>

<mosaic_0001>
module attributes {stable_mosaic.version = 11 : i64} {
  func.func @_time_aware_embedding_kernel(%arg0: i32, %arg1: memref<16x2xi32, #tpu.memory_space<vmem>>, %arg2: memref<232x128xf32, #tpu.memory_space<vmem>>, %arg3: memref<16x128xf32, #tpu.memory_space<vmem>>) attributes {dimension_semantics = [#tpu.dimension_semantics<parallel>], iteration_bounds = array<i64: 1>, scalar_prefetch = 0 : i64, scratch_operands = 0 : i64, tpu.core_type = #tpu.core_type<tc>, window_params = [{transform_indices = @transform_0, window_bounds = array<i64: 16, 2>}, {pipeline_mode = #tpu.pipeline_mode<synchronous>, transform_indices = @transform_1, window_bounds = array<i64: 232, 128>}, {transform_indices = @transform_2, window_bounds = array<i64: 16, 128>}]} {
    %c0 = arith.constant 0 : index
    %c0_0 = arith.constant 0 : index
    %0 = vector.load %arg1[%c0, %c0_0] : memref<16x2xi32, #tpu.memory_space<vmem>>, vector<16x2xi32>
    %1 = vector.extract_strided_slice %0 {offsets = [0, 0], sizes = [16, 1], strides = [1, 1]} : vector<16x2xi32> to vector<16x1xi32>
    %2 = vector.extract_strided_slice %0 {offsets = [0, 1], sizes = [16, 1], strides = [1, 1]} : vector<16x2xi32> to vector<16x1xi32>
    %c64_i32 = arith.constant 64 : i32
    %3 = vector.broadcast %c64_i32 : i32 to vector<16x1xi32>
    %4 = arith.addi %2, %3 : vector<16x1xi32>
    %5 = tpu.iota {dimensions = array<i32: 1>} : vector<16x232xi32>
    %6 = vector.broadcast %1 : vector<16x1xi32> to vector<16x232xi32>
    %7 = arith.cmpi eq, %5, %6 : vector<16x232xi32>
    %8 = vector.broadcast %4 : vector<16x1xi32> to vector<16x232xi32>
    %9 = arith.cmpi eq, %5, %8 : vector<16x232xi32>
    %10 = arith.ori %7, %9 : vector<16x232xi1>
    %11 = arith.extui %10 : vector<16x232xi1> to vector<16x232xi32>
    %12 = arith.sitofp %11 : vector<16x232xi32> to vector<16x232xf32>
    %c0_1 = arith.constant 0 : index
    %c0_2 = arith.constant 0 : index
    %13 = vector.load %arg2[%c0_1, %c0_2] : memref<232x128xf32, #tpu.memory_space<vmem>>, vector<232x128xf32>
    %cst = arith.constant dense<0.000000e+00> : vector<16x128xf32>
    %14 = tpu.matmul %12, %13, %cst {dimension_numbers = #tpu.dot_dimension_numbers<[1], [0], [0], [1], [0, 0, 1, 1], [], []>, precision = #tpu.contract_precision<fp32>} : vector<16x232xf32>, vector<232x128xf32>, vector<16x128xf32> -> vector<16x128xf32>
    %c0_3 = arith.constant 0 : index
    %c0_4 = arith.constant 0 : index
    %15 = vector.load %arg3[%c0_3, %c0_4] : memref<16x128xf32, #tpu.memory_space<vmem>>, vector<16x128xf32>
    tpu.vector_store %arg3[%c0_3, %c0_4], %14 {strides = array<i32>} : memref<16x128xf32, #tpu.memory_space<vmem>>, vector<16x128xf32>,
    return
  }
  func.func @transform_0(%arg0: i32) -> (i32, i32) {
    %c0_i32 = arith.constant 0 : i32
    %c0_i32_0 = arith.constant 0 : i32
    return %arg0, %c0_i32 : i32, i32
  }
  func.func @transform_1(%arg0: i32) -> (i32, i32) {
    %c0_i32 = arith.constant 0 : i32
    %c0_i32_0 = arith.constant 0 : i32
    %c0_i32_1 = arith.constant 0 : i32
    return %c0_i32, %c0_i32_0 : i32, i32
  }
  func.func @transform_2(%arg0: i32) -> (i32, i32) {
    %c0_i32 = arith.constant 0 : i32
    %c0_i32_0 = arith.constant 0 : i32
    return %arg0, %c0_i32 : i32, i32
  }
}

</mosaic_0001>

<llo_original>
// kernel: tpu_custom_call.1
$region0: #{tpu_custom_call.1}
  #allocation0 [shape = 'u32[]', space=smem, size = 0x4, offset = 0x4, fixed_abs, tag = 'smem constant byte address 0x4 - core index']
  #allocation1 [shape = 'u32[72,128]{1,0:T(1,128)}', space=vmem, size = 0x9000, scoped, tag = 'internal scratch']
  %s0 = inlined_call_operand.vmem [shape: s32[16,2], index: 0, kind: input, shape index: {}]
  %s1 = inlined_call_operand.hbm [shape: f32[232,128], index: 1, kind: input, shape index: {}]
  %s2 = inlined_call_operand.hbm [shape: f32[16,128], index: 2, kind: output, shape index: {}]
  %s3 = sld [smem:[#allocation0]]
  $region22: #{tpu_custom_call.1} parent=0
    _
  %s5 = ssub.s32 1, %s3
  %s6 = scalar_select 0, %s5, %s3
  $region1: #{tpu_custom_call.1} parent=0
    #allocation2 [shape = 'u8[118784]{0}', space=vmem, size = 0x1d000, scoped, tag = 'input window, operand 1, single buffered']
    #allocation3 [shape = 's32[1]{0}', space=sflag, size = 0x4, scoped, tag = 'scoped memory for tpu_custom_call.1']
    #allocation4 [shape = 's32[1]{0}', space=sflag, size = 0x4, scoped, tag = 'scoped memory for tpu_custom_call.1']
    #allocation5 [shape = 'u8[8192]{0}', space=vmem, size = 0x2000, scoped, tag = 'output window, operand 0, single buffered']
    %7 = vsyncpa [#allocation3], 0
    %8 = vsyncpa [#allocation4], 0
    // Predicated region
    $region2: #{tpu_custom_call.1} parent=1 // pred_check
      _
    $region3: #{tpu_custom_call.1} parent=1 // pred_check_branch
      %10 = sbr.rel (0) target = $region5
    $region4: #{tpu_custom_call.1} parent=1 // pred_region
      _
    $region5: #{tpu_custom_call.1} parent=1 // pred_fallthru
      _
    // Predicated region
    $region6: #{tpu_custom_call.1} parent=1 // pred_check
      _
    $region7: #{tpu_custom_call.1} parent=1 // pred_check_branch
      %12 = sbr.rel (0) target = $region9
    $region8: #{tpu_custom_call.1} parent=1 // pred_region
      %14 = vsyncadd [#allocation3], 0
      %s15 = sshll.u32 %s1, 4
      %s16 = int_to_ptr.hbm [resolvable:$true] %s15
      %s17 = sshll.u32 [#allocation2], 4
      %s18 = int_to_ptr.vmem [resolvable:$true] %s17
      %23 = dma.hbm_to_vmem [thread:$0]  %s16, 3712, %s18, [#allocation3], 128, 128, 8
    $region9: #{tpu_custom_call.1} parent=1 // pred_fallthru
      _
    // Predicated region
    $region10: #{tpu_custom_call.1} parent=1 // pred_check
      _
    $region11: #{tpu_custom_call.1} parent=1 // pred_check_branch
      %25 = sbr.rel (0) target = $region13
    $region12: #{tpu_custom_call.1} parent=1 // pred_region
      %27 = dma.done [#allocation3], 3712
    $region13: #{tpu_custom_call.1} parent=1 // pred_fallthru
      _
    %v28 = vld [vmem:[%s0] sm:$0xff]
    %v29 = vld [vmem:[%s0 + $0x8] sm:$0xff]
    %v30 = vadd.s32 %v28, 64
    %v31 = vadd.s32 %v29, 64
    %v32 = vlaneseq
    %v33 = vand.u32 %v32, 127
    %v34 = vadd.s32 %v33, 128
    %35 = vset.pattern.permute.xlu0 0
    %36 = vperm.xlu0 %35, %v28
    %v37 = vpop.permute.xlu0 %36
    %38 = vset.pattern.permute.xlu0 0
    %39 = vperm.xlu0 %38, %v29
    %v40 = vpop.permute.xlu0 %39
    %vm41 = vcmp.eq.s32.totalorder %v33, %v37
    %vm42 = vcmp.eq.s32.totalorder %v34, %v37
    %vm43 = vcmp.eq.s32.totalorder %v33, %v40
    %vm44 = vcmp.eq.s32.totalorder %v34, %v40
    %45 = vset.pattern.permute.xlu0 1
    %46 = vperm.xlu0 %45, %v30
    %v47 = vpop.permute.xlu0 %46
    %48 = vset.pattern.permute.xlu0 1
    %49 = vperm.xlu0 %48, %v31
    %v50 = vpop.permute.xlu0 %49
    %vm51 = vcmp.eq.s32.totalorder %v33, %v47
    %vm52 = vcmp.eq.s32.totalorder %v34, %v47
    %vm53 = vcmp.eq.s32.totalorder %v33, %v50
    %vm54 = vcmp.eq.s32.totalorder %v34, %v50
    %vm55 = vmor %vm41, %vm51
    %vm56 = vmor %vm42, %vm52
    %vm57 = vmor %vm43, %vm53
    %vm58 = vmor %vm44, %vm54
    %v59 = vsel %vm55, 1, 0
    %v60 = vsel %vm56, 1, 0
    %v61 = vsel %vm57, 1, 0
    %v62 = vsel %vm58, 1, 0
    %v63 = vcvt.s32.f32 %v59
    %v64 = vcvt.s32.f32 %v60
    %v65 = vcvt.s32.f32 %v61
    %v66 = vcvt.s32.f32 %v62
    %v67 = vld [vmem:[#allocation2] sm:$0xff]
    %v68 = vld [vmem:[#allocation2 + $0x8] sm:$0xff]
    %v69 = vld [vmem:[#allocation2 + $0x10] sm:$0xff]
    %v70 = vld [vmem:[#allocation2 + $0x18] sm:$0xff]
    %v71 = vld [vmem:[#allocation2 + $0x20] sm:$0xff]
    %v72 = vld [vmem:[#allocation2 + $0x28] sm:$0xff]
    %v73 = vld [vmem:[#allocation2 + $0x30] sm:$0xff]
    %v74 = vld [vmem:[#allocation2 + $0x38] sm:$0xff]
    %v75 = vld [vmem:[#allocation2 + $0x40] sm:$0xff]
    %v76 = vld [vmem:[#allocation2 + $0x48] sm:$0xff]
    %v77 = vld [vmem:[#allocation2 + $0x50] sm:$0xff]
    %v78 = vld [vmem:[#allocation2 + $0x58] sm:$0xff]
    %v79 = vld [vmem:[#allocation2 + $0x60] sm:$0xff]
    %v80 = vld [vmem:[#allocation2 + $0x68] sm:$0xff]
    %v81 = vld [vmem:[#allocation2 + $0x70] sm:$0xff]
    %v82 = vld [vmem:[#allocation2 + $0x78] sm:$0xff]
    %v83 = vld [vmem:[#allocation2 + $0x80] sm:$0xff]
    %v84 = vld [vmem:[#allocation2 + $0x88] sm:$0xff]
    %v85 = vld [vmem:[#allocation2 + $0x90] sm:$0xff]
    %v86 = vld [vmem:[#allocation2 + $0x98] sm:$0xff]
    %v87 = vld [vmem:[#allocation2 + $0xa0] sm:$0xff]
    %v88 = vld [vmem:[#allocation2 + $0xa8] sm:$0xff]
    %v89 = vld [vmem:[#allocation2 + $0xb0] sm:$0xff]
    %v90 = vld [vmem:[#allocation2 + $0xb8] sm:$0xff]
    %v91 = vld [vmem:[#allocation2 + $0xc0] sm:$0xff]
    %v92 = vld [vmem:[#allocation2 + $0xc8] sm:$0xff]
    %v93 = vld [vmem:[#allocation2 + $0xd0] sm:$0xff]
    %v94 = vld [vmem:[#allocation2 + $0xd8] sm:$0xff]
    %v95 = vld [vmem:[#allocation2 + $0xe0] sm:$0xff]
    %vm96 = vcmask 850944
    %v98 = vsel %vm96, %v64, 0
    %v101 = vsel %vm96, %v66, 0
    %v103 = vand.u32 %v82, 4294901760
    %104 = vmatpush.msra.mxu0 %v103
    %v105 = vand.u32 %v81, 4294901760
    %106 = vmatpush.msra.mxu0 %v105
    %v107 = vand.u32 %v80, 4294901760
    %108 = vmatpush.msra.mxu0 %v107
    %v109 = vand.u32 %v79, 4294901760
    %110 = vmatpush.msra.mxu0 %v109
    %v111 = vand.u32 %v78, 4294901760
    %112 = vmatpush.msra.mxu0 %v111
    %v113 = vand.u32 %v77, 4294901760
    %114 = vmatpush.msra.mxu0 %v113
    %v115 = vand.u32 %v76, 4294901760
    %116 = vmatpush.msra.mxu0 %v115
    %v117 = vand.u32 %v75, 4294901760
    %118 = vmatpush.msra.mxu0 %v117
    %v119 = vand.u32 %v74, 4294901760
    %120 = vmatpush.msra.mxu0 %v119
    %v121 = vand.u32 %v73, 4294901760
    %122 = vmatpush.msra.mxu0 %v121
    %v123 = vand.u32 %v72, 4294901760
    %124 = vmatpush.msra.mxu0 %v123
    %v125 = vand.u32 %v71, 4294901760
    %126 = vmatpush.msra.mxu0 %v125
    %v127 = vand.u32 %v70, 4294901760
    %128 = vmatpush.msra.mxu0 %v127
    %v129 = vand.u32 %v69, 4294901760
    %130 = vmatpush.msra.mxu0 %v129
    %v131 = vand.u32 %v68, 4294901760
    %132 = vmatpush.msra.mxu0 %v131
    %v133 = vand.u32 %v67, 4294901760
    %134 = vmatpush.msra.mxu0 %v133
    %v135 = vand.u32 %v63, 4294901760
    %v136 = vsub.f32 %v63, %v135
    %v137 = vand.u32 %v136, 4294901760
    %v138 = vsub.f32 %v136, %v137
    %v139 = vand.u32 %v138, 4294901760
    %140 = vmatmul.f32.gmra.mxu0 %v139
    %v141 = vpop.f32.mrf.mxu0
    %v142 = vadd.f32 0.0, %v141
    %v143 = vand.u32 %v65, 4294901760
    %v144 = vsub.f32 %v65, %v143
    %v145 = vand.u32 %v144, 4294901760
    %v146 = vsub.f32 %v144, %v145
    %v147 = vand.u32 %v146, 4294901760
    %148 = vmatmul.f32.gmra.mxu0 %v147
    %v149 = vpop.f32.mrf.mxu0
    %v150 = vadd.f32 0.0, %v149
    %151 = vdwg.mxu0
    %v152 = vand.u32 %v82, 4294901760
    %v153 = vsub.f32 %v82, %v152
    %v154 = vand.u32 %v153, 4294901760
    %v155 = vsub.f32 %v153, %v154
    %v156 = vand.u32 %v155, 4294901760
    %157 = vmatpush.msra.mxu0 %v156
    %v158 = vand.u32 %v81, 4294901760
    %v159 = vsub.f32 %v81, %v158
    %v160 = vand.u32 %v159, 4294901760
    %v161 = vsub.f32 %v159, %v160
    %v162 = vand.u32 %v161, 4294901760
    %163 = vmatpush.msra.mxu0 %v162
    %v164 = vand.u32 %v80, 4294901760
    %v165 = vsub.f32 %v80, %v164
    %v166 = vand.u32 %v165, 4294901760
    %v167 = vsub.f32 %v165, %v166
    %v168 = vand.u32 %v167, 4294901760
    %169 = vmatpush.msra.mxu0 %v168
    %v170 = vand.u32 %v79, 4294901760
    %v171 = vsub.f32 %v79, %v170
    %v172 = vand.u32 %v171, 4294901760
    %v173 = vsub.f32 %v171, %v172
    %v174 = vand.u32 %v173, 4294901760
    %175 = vmatpush.msra.mxu0 %v174
    %v176 = vand.u32 %v78, 4294901760
    %v177 = vsub.f32 %v78, %v176
    %v178 = vand.u32 %v177, 4294901760
    %v179 = vsub.f32 %v177, %v178
    %v180 = vand.u32 %v179, 4294901760
    %181 = vmatpush.msra.mxu0 %v180
    %v182 = vand.u32 %v77, 4294901760
    %v183 = vsub.f32 %v77, %v182
    %v184 = vand.u32 %v183, 4294901760
    %v185 = vsub.f32 %v183, %v184
    %v186 = vand.u32 %v185, 4294901760
    %187 = vmatpush.msra.mxu0 %v186
    %v188 = vand.u32 %v76, 4294901760
    %v189 = vsub.f32 %v76, %v188
    %v190 = vand.u32 %v189, 4294901760
    %v191 = vsub.f32 %v189, %v190
    %v192 = vand.u32 %v191, 4294901760
    %193 = vmatpush.msra.mxu0 %v192
    %v194 = vand.u32 %v75, 4294901760
    %v195 = vsub.f32 %v75, %v194
    %v196 = vand.u32 %v195, 4294901760
    %v197 = vsub.f32 %v195, %v196
    %v198 = vand.u32 %v197, 4294901760
    %199 = vmatpush.msra.mxu0 %v198
    %v200 = vand.u32 %v74, 4294901760
    %v201 = vsub.f32 %v74, %v200
    %v202 = vand.u32 %v201, 4294901760
    %v203 = vsub.f32 %v201, %v202
    %v204 = vand.u32 %v203, 4294901760
    %205 = vmatpush.msra.mxu0 %v204
    %v206 = vand.u32 %v73, 4294901760
    %v207 = vsub.f32 %v73, %v206
    %v208 = vand.u32 %v207, 4294901760
    %v209 = vsub.f32 %v207, %v208
    %v210 = vand.u32 %v209, 4294901760
    %211 = vmatpush.msra.mxu0 %v210
    %v212 = vand.u32 %v72, 4294901760
    %v213 = vsub.f32 %v72, %v212
    %v214 = vand.u32 %v213, 4294901760
    %v215 = vsub.f32 %v213, %v214
    %v216 = vand.u32 %v215, 4294901760
    %217 = vmatpush.msra.mxu0 %v216
    %v218 = vand.u32 %v71, 4294901760
    %v219 = vsub.f32 %v71, %v218
    %v220 = vand.u32 %v219, 4294901760
    %v221 = vsub.f32 %v219, %v220
    %v222 = vand.u32 %v221, 4294901760
    %223 = vmatpush.msra.mxu0 %v222
    %v224 = vand.u32 %v70, 4294901760
    %v225 = vsub.f32 %v70, %v224
    %v226 = vand.u32 %v225, 4294901760
    %v227 = vsub.f32 %v225, %v226
    %v228 = vand.u32 %v227, 4294901760
    %229 = vmatpush.msra.mxu0 %v228
    %v230 = vand.u32 %v69, 4294901760
    %v231 = vsub.f32 %v69, %v230
    %v232 = vand.u32 %v231, 4294901760
    %v233 = vsub.f32 %v231, %v232
    %v234 = vand.u32 %v233, 4294901760
    %235 = vmatpush.msra.mxu0 %v234
    %v236 = vand.u32 %v68, 4294901760
    %v237 = vsub.f32 %v68, %v236
    %v238 = vand.u32 %v237, 4294901760
    %v239 = vsub.f32 %v237, %v238
    %v240 = vand.u32 %v239, 4294901760
    %241 = vmatpush.msra.mxu0 %v240
    %v242 = vand.u32 %v67, 4294901760
    %v243 = vsub.f32 %v67, %v242
    %v244 = vand.u32 %v243, 4294901760
    %v245 = vsub.f32 %v243, %v244
    %v246 = vand.u32 %v245, 4294901760
    %247 = vmatpush.msra.mxu0 %v246
    %v248 = vand.u32 %v63, 4294901760
    %249 = vmatmul.f32.gmra.mxu0 %v248
    %v250 = vpop.f32.mrf.mxu0
    %v251 = vadd.f32 %v142, %v250
    %v252 = vand.u32 %v65, 4294901760
    %253 = vmatmul.f32.gmra.mxu0 %v252
    %v254 = vpop.f32.mrf.mxu0
    %v255 = vadd.f32 %v150, %v254
    %256 = vdwg.mxu0
    %v257 = vand.u32 %v82, 4294901760
    %v258 = vsub.f32 %v82, %v257
    %259 = vmatpush.msra.mxu0 %v258
    %v260 = vand.u32 %v81, 4294901760
    %v261 = vsub.f32 %v81, %v260
    %262 = vmatpush.msra.mxu0 %v261
    %v263 = vand.u32 %v80, 4294901760
    %v264 = vsub.f32 %v80, %v263
    %265 = vmatpush.msra.mxu0 %v264
    %v266 = vand.u32 %v79, 4294901760
    %v267 = vsub.f32 %v79, %v266
    %268 = vmatpush.msra.mxu0 %v267
    %v269 = vand.u32 %v78, 4294901760
    %v270 = vsub.f32 %v78, %v269
    %271 = vmatpush.msra.mxu0 %v270
    %v272 = vand.u32 %v77, 4294901760
    %v273 = vsub.f32 %v77, %v272
    %274 = vmatpush.msra.mxu0 %v273
    %v275 = vand.u32 %v76, 4294901760
    %v276 = vsub.f32 %v76, %v275
    %277 = vmatpush.msra.mxu0 %v276
    %v278 = vand.u32 %v75, 4294901760
    %v279 = vsub.f32 %v75, %v278
    %280 = vmatpush.msra.mxu0 %v279
    %v281 = vand.u32 %v74, 4294901760
    %v282 = vsub.f32 %v74, %v281
    %283 = vmatpush.msra.mxu0 %v282
    %v284 = vand.u32 %v73, 4294901760
    %v285 = vsub.f32 %v73, %v284
    %286 = vmatpush.msra.mxu0 %v285
    %v287 = vand.u32 %v72, 4294901760
    %v288 = vsub.f32 %v72, %v287
    %289 = vmatpush.msra.mxu0 %v288
    %v290 = vand.u32 %v71, 4294901760
    %v291 = vsub.f32 %v71, %v290
    %292 = vmatpush.msra.mxu0 %v291
    %v293 = vand.u32 %v70, 4294901760
    %v294 = vsub.f32 %v70, %v293
    %295 = vmatpush.msra.mxu0 %v294
    %v296 = vand.u32 %v69, 4294901760
    %v297 = vsub.f32 %v69, %v296
    %298 = vmatpush.msra.mxu0 %v297
    %v299 = vand.u32 %v68, 4294901760
    %v300 = vsub.f32 %v68, %v299
    %301 = vmatpush.msra.mxu0 %v300
    %v302 = vand.u32 %v67, 4294901760
    %v303 = vsub.f32 %v67, %v302
    %304 = vmatpush.msra.mxu0 %v303
    %v305 = vand.u32 %v63, 4294901760
    %v306 = vsub.f32 %v63, %v305
    %307 = vmatmul.f32.gmra.mxu0 %v306
    %v308 = vpop.f32.mrf.mxu0
    %v309 = vadd.f32 %v251, %v308
    %v310 = vand.u32 %v65, 4294901760
    %v311 = vsub.f32 %v65, %v310
    %312 = vmatmul.f32.gmra.mxu0 %v311
    %v313 = vpop.f32.mrf.mxu0
    %v314 = vadd.f32 %v255, %v313
    %315 = vdwg.mxu0
    %v316 = vand.u32 %v82, 4294901760
    %317 = vmatpush.msra.mxu0 %v316
    %v318 = vand.u32 %v81, 4294901760
    %319 = vmatpush.msra.mxu0 %v318
    %v320 = vand.u32 %v80, 4294901760
    %321 = vmatpush.msra.mxu0 %v320
    %v322 = vand.u32 %v79, 4294901760
    %323 = vmatpush.msra.mxu0 %v322
    %v324 = vand.u32 %v78, 4294901760
    %325 = vmatpush.msra.mxu0 %v324
    %v326 = vand.u32 %v77, 4294901760
    %327 = vmatpush.msra.mxu0 %v326
    %v328 = vand.u32 %v76, 4294901760
    %329 = vmatpush.msra.mxu0 %v328
    %v330 = vand.u32 %v75, 4294901760
    %331 = vmatpush.msra.mxu0 %v330
    %v332 = vand.u32 %v74, 4294901760
    %333 = vmatpush.msra.mxu0 %v332
    %v334 = vand.u32 %v73, 4294901760
    %335 = vmatpush.msra.mxu0 %v334
    %v336 = vand.u32 %v72, 4294901760
    %337 = vmatpush.msra.mxu0 %v336
    %v338 = vand.u32 %v71, 4294901760
    %339 = vmatpush.msra.mxu0 %v338
    %v340 = vand.u32 %v70, 4294901760
    %341 = vmatpush.msra.mxu0 %v340
    %v342 = vand.u32 %v69, 4294901760
    %343 = vmatpush.msra.mxu0 %v342
    %v344 = vand.u32 %v68, 4294901760
    %345 = vmatpush.msra.mxu0 %v344
    %v346 = vand.u32 %v67, 4294901760
    %347 = vmatpush.msra.mxu0 %v346
    %v348 = vand.u32 %v63, 4294901760
    %v349 = vsub.f32 %v63, %v348
    %v350 = vand.u32 %v349, 4294901760
    %351 = vmatmul.f32.gmra.mxu0 %v350
    %v352 = vpop.f32.mrf.mxu0
    %v353 = vadd.f32 %v309, %v352
    %v354 = vand.u32 %v65, 4294901760
    %v355 = vsub.f32 %v65, %v354
    %v356 = vand.u32 %v355, 4294901760
    %357 = vmatmul.f32.gmra.mxu0 %v356
    %v358 = vpop.f32.mrf.mxu0
    %v359 = vadd.f32 %v314, %v358
    %360 = vdwg.mxu0
    %v361 = vand.u32 %v82, 4294901760
    %v362 = vsub.f32 %v82, %v361
    %v363 = vand.u32 %v362, 4294901760
    %364 = vmatpush.msra.mxu0 %v363
    %v365 = vand.u32 %v81, 4294901760
    %v366 = vsub.f32 %v81, %v365
    %v367 = vand.u32 %v366, 4294901760
    %368 = vmatpush.msra.mxu0 %v367
    %v369 = vand.u32 %v80, 4294901760
    %v370 = vsub.f32 %v80, %v369
    %v371 = vand.u32 %v370, 4294901760
    %372 = vmatpush.msra.mxu0 %v371
    %v373 = vand.u32 %v79, 4294901760
    %v374 = vsub.f32 %v79, %v373
    %v375 = vand.u32 %v374, 4294901760
    %376 = vmatpush.msra.mxu0 %v375
    %v377 = vand.u32 %v78, 4294901760
    %v378 = vsub.f32 %v78, %v377
    %v379 = vand.u32 %v378, 4294901760
    %380 = vmatpush.msra.mxu0 %v379
    %v381 = vand.u32 %v77, 4294901760
    %v382 = vsub.f32 %v77, %v381
    %v383 = vand.u32 %v382, 4294901760
    %384 = vmatpush.msra.mxu0 %v383
    %v385 = vand.u32 %v76, 4294901760
    %v386 = vsub.f32 %v76, %v385
    %v387 = vand.u32 %v386, 4294901760
    %388 = vmatpush.msra.mxu0 %v387
    %v389 = vand.u32 %v75, 4294901760
    %v390 = vsub.f32 %v75, %v389
    %v391 = vand.u32 %v390, 4294901760
    %392 = vmatpush.msra.mxu0 %v391
    %v393 = vand.u32 %v74, 4294901760
    %v394 = vsub.f32 %v74, %v393
    %v395 = vand.u32 %v394, 4294901760
    %396 = vmatpush.msra.mxu0 %v395
    %v397 = vand.u32 %v73, 4294901760
    %v398 = vsub.f32 %v73, %v397
    %v399 = vand.u32 %v398, 4294901760
    %400 = vmatpush.msra.mxu0 %v399
    %v401 = vand.u32 %v72, 4294901760
    %v402 = vsub.f32 %v72, %v401
    %v403 = vand.u32 %v402, 4294901760
    %404 = vmatpush.msra.mxu0 %v403
    %v405 = vand.u32 %v71, 4294901760
    %v406 = vsub.f32 %v71, %v405
    %v407 = vand.u32 %v406, 4294901760
    %408 = vmatpush.msra.mxu0 %v407
    %v409 = vand.u32 %v70, 4294901760
    %v410 = vsub.f32 %v70, %v409
    %v411 = vand.u32 %v410, 4294901760
    %412 = vmatpush.msra.mxu0 %v411
    %v413 = vand.u32 %v69, 4294901760
    %v414 = vsub.f32 %v69, %v413
    %v415 = vand.u32 %v414, 4294901760
    %416 = vmatpush.msra.mxu0 %v415
    %v417 = vand.u32 %v68, 4294901760
    %v418 = vsub.f32 %v68, %v417
    %v419 = vand.u32 %v418, 4294901760
    %420 = vmatpush.msra.mxu0 %v419
    %v421 = vand.u32 %v67, 4294901760
    %v422 = vsub.f32 %v67, %v421
    %v423 = vand.u32 %v422, 4294901760
    %424 = vmatpush.msra.mxu0 %v423
    %v425 = vand.u32 %v63, 4294901760
    %426 = vmatmul.f32.gmra.mxu0 %v425
    %v427 = vpop.f32.mrf.mxu0
    %v428 = vadd.f32 %v353, %v427
    %v429 = vand.u32 %v65, 4294901760
    %430 = vmatmul.f32.gmra.mxu0 %v429
    %v431 = vpop.f32.mrf.mxu0
    %v432 = vadd.f32 %v359, %v431
    %433 = vdwg.mxu0
    %v434 = vand.u32 %v82, 4294901760
    %435 = vmatpush.msra.mxu0 %v434
    %v436 = vand.u32 %v81, 4294901760
    %437 = vmatpush.msra.mxu0 %v436
    %v438 = vand.u32 %v80, 4294901760
    %439 = vmatpush.msra.mxu0 %v438
    %v440 = vand.u32 %v79, 4294901760
    %441 = vmatpush.msra.mxu0 %v440
    %v442 = vand.u32 %v78, 4294901760
    %443 = vmatpush.msra.mxu0 %v442
    %v444 = vand.u32 %v77, 4294901760
    %445 = vmatpush.msra.mxu0 %v444
    %v446 = vand.u32 %v76, 4294901760
    %447 = vmatpush.msra.mxu0 %v446
    %v448 = vand.u32 %v75, 4294901760
    %449 = vmatpush.msra.mxu0 %v448
    %v450 = vand.u32 %v74, 4294901760
    %451 = vmatpush.msra.mxu0 %v450
    %v452 = vand.u32 %v73, 4294901760
    %453 = vmatpush.msra.mxu0 %v452
    %v454 = vand.u32 %v72, 4294901760
    %455 = vmatpush.msra.mxu0 %v454
    %v456 = vand.u32 %v71, 4294901760
    %457 = vmatpush.msra.mxu0 %v456
    %v458 = vand.u32 %v70, 4294901760
    %459 = vmatpush.msra.mxu0 %v458
    %v460 = vand.u32 %v69, 4294901760
    %461 = vmatpush.msra.mxu0 %v460
    %v462 = vand.u32 %v68, 4294901760
    %463 = vmatpush.msra.mxu0 %v462
    %v464 = vand.u32 %v67, 4294901760
    %465 = vmatpush.msra.mxu0 %v464
    %v466 = vand.u32 %v63, 4294901760
    %467 = vmatmul.f32.gmra.mxu0 %v466
    %v468 = vpop.f32.mrf.mxu0
    %v469 = vadd.f32 %v428, %v468
    %v470 = vand.u32 %v65, 4294901760
    %471 = vmatmul.f32.gmra.mxu0 %v470
    %v472 = vpop.f32.mrf.mxu0
    %v473 = vadd.f32 %v432, %v472
    %474 = vdwg.mxu0
    %475 = vmatpush.msra.mxu0 0.0
    %476 = vmatpush.msra.mxu0 0.0
    %477 = vmatpush.msra.mxu0 0.0
    %v478 = vand.u32 %v95, 4294901760
    %479 = vmatpush.msra.mxu0 %v478
    %v480 = vand.u32 %v94, 4294901760
    %481 = vmatpush.msra.mxu0 %v480
    %v482 = vand.u32 %v93, 4294901760
    %483 = vmatpush.msra.mxu0 %v482
    %v484 = vand.u32 %v92, 4294901760
    %485 = vmatpush.msra.mxu0 %v484
    %v486 = vand.u32 %v91, 4294901760
    %487 = vmatpush.msra.mxu0 %v486
    %v488 = vand.u32 %v90, 4294901760
    %489 = vmatpush.msra.mxu0 %v488
    %v490 = vand.u32 %v89, 4294901760
    %491 = vmatpush.msra.mxu0 %v490
    %v492 = vand.u32 %v88, 4294901760
    %493 = vmatpush.msra.mxu0 %v492
    %v494 = vand.u32 %v87, 4294901760
    %495 = vmatpush.msra.mxu0 %v494
    %v496 = vand.u32 %v86, 4294901760
    %497 = vmatpush.msra.mxu0 %v496
    %v498 = vand.u32 %v85, 4294901760
    %499 = vmatpush.msra.mxu0 %v498
    %v500 = vand.u32 %v84, 4294901760
    %501 = vmatpush.msra.mxu0 %v500
    %v502 = vand.u32 %v83, 4294901760
    %503 = vmatpush.msra.mxu0 %v502
    %v504 = vand.u32 %v98, 4294901760
    %v505 = vsub.f32 %v98, %v504
    %v506 = vand.u32 %v505, 4294901760
    %v507 = vsub.f32 %v505, %v506
    %v508 = vand.u32 %v507, 4294901760
    %509 = vmatmul.f32.gmra.mxu0 %v508
    %v510 = vpop.f32.mrf.mxu0
    %v511 = vadd.f32 %v469, %v510
    %v512 = vand.u32 %v101, 4294901760
    %v513 = vsub.f32 %v101, %v512
    %v514 = vand.u32 %v513, 4294901760
    %v515 = vsub.f32 %v513, %v514
    %v516 = vand.u32 %v515, 4294901760
    %517 = vmatmul.f32.gmra.mxu0 %v516
    %v518 = vpop.f32.mrf.mxu0
    %v519 = vadd.f32 %v473, %v518
    %520 = vdwg.mxu0
    %521 = vmatpush.msra.mxu0 0.0
    %522 = vmatpush.msra.mxu0 0.0
    %523 = vmatpush.msra.mxu0 0.0
    %v524 = vand.u32 %v95, 4294901760
    %v525 = vsub.f32 %v95, %v524
    %v526 = vand.u32 %v525, 4294901760
    %v527 = vsub.f32 %v525, %v526
    %v528 = vand.u32 %v527, 4294901760
    %529 = vmatpush.msra.mxu0 %v528
    %v530 = vand.u32 %v94, 4294901760
    %v531 = vsub.f32 %v94, %v530
    %v532 = vand.u32 %v531, 4294901760
    %v533 = vsub.f32 %v531, %v532
    %v534 = vand.u32 %v533, 4294901760
    %535 = vmatpush.msra.mxu0 %v534
    %v536 = vand.u32 %v93, 4294901760
    %v537 = vsub.f32 %v93, %v536
    %v538 = vand.u32 %v537, 4294901760
    %v539 = vsub.f32 %v537, %v538
    %v540 = vand.u32 %v539, 4294901760
    %541 = vmatpush.msra.mxu0 %v540
    %v542 = vand.u32 %v92, 4294901760
    %v543 = vsub.f32 %v92, %v542
    %v544 = vand.u32 %v543, 4294901760
    %v545 = vsub.f32 %v543, %v544
    %v546 = vand.u32 %v545, 4294901760
    %547 = vmatpush.msra.mxu0 %v546
    %v548 = vand.u32 %v91, 4294901760
    %v549 = vsub.f32 %v91, %v548
    %v550 = vand.u32 %v549, 4294901760
    %v551 = vsub.f32 %v549, %v550
    %v552 = vand.u32 %v551, 4294901760
    %553 = vmatpush.msra.mxu0 %v552
    %v554 = vand.u32 %v90, 4294901760
    %v555 = vsub.f32 %v90, %v554
    %v556 = vand.u32 %v555, 4294901760
    %v557 = vsub.f32 %v555, %v556
    %v558 = vand.u32 %v557, 4294901760
    %559 = vmatpush.msra.mxu0 %v558
    %v560 = vand.u32 %v89, 4294901760
    %v561 = vsub.f32 %v89, %v560
    %v562 = vand.u32 %v561, 4294901760
    %v563 = vsub.f32 %v561, %v562
    %v564 = vand.u32 %v563, 4294901760
    %565 = vmatpush.msra.mxu0 %v564
    %v566 = vand.u32 %v88, 4294901760
    %v567 = vsub.f32 %v88, %v566
    %v568 = vand.u32 %v567, 4294901760
    %v569 = vsub.f32 %v567, %v568
    %v570 = vand.u32 %v569, 4294901760
    %571 = vmatpush.msra.mxu0 %v570
    %v572 = vand.u32 %v87, 4294901760
    %v573 = vsub.f32 %v87, %v572
    %v574 = vand.u32 %v573, 4294901760
    %v575 = vsub.f32 %v573, %v574
    %v576 = vand.u32 %v575, 4294901760
    %577 = vmatpush.msra.mxu0 %v576
    %v578 = vand.u32 %v86, 4294901760
    %v579 = vsub.f32 %v86, %v578
    %v580 = vand.u32 %v579, 4294901760
    %v581 = vsub.f32 %v579, %v580
    %v582 = vand.u32 %v581, 4294901760
    %583 = vmatpush.msra.mxu0 %v582
    %v584 = vand.u32 %v85, 4294901760
    %v585 = vsub.f32 %v85, %v584
    %v586 = vand.u32 %v585, 4294901760
    %v587 = vsub.f32 %v585, %v586
    %v588 = vand.u32 %v587, 4294901760
    %589 = vmatpush.msra.mxu0 %v588
    %v590 = vand.u32 %v84, 4294901760
    %v591 = vsub.f32 %v84, %v590
    %v592 = vand.u32 %v591, 4294901760
    %v593 = vsub.f32 %v591, %v592
    %v594 = vand.u32 %v593, 4294901760
    %595 = vmatpush.msra.mxu0 %v594
    %v596 = vand.u32 %v83, 4294901760
    %v597 = vsub.f32 %v83, %v596
    %v598 = vand.u32 %v597, 4294901760
    %v599 = vsub.f32 %v597, %v598
    %v600 = vand.u32 %v599, 4294901760
    %601 = vmatpush.msra.mxu0 %v600
    %v602 = vand.u32 %v98, 4294901760
    %603 = vmatmul.f32.gmra.mxu0 %v602
    %v604 = vpop.f32.mrf.mxu0
    %v605 = vadd.f32 %v511, %v604
    %v606 = vand.u32 %v101, 4294901760
    %607 = vmatmul.f32.gmra.mxu0 %v606
    %v608 = vpop.f32.mrf.mxu0
    %v609 = vadd.f32 %v519, %v608
    %610 = vdwg.mxu0
    %611 = vmatpush.msra.mxu0 0.0
    %612 = vmatpush.msra.mxu0 0.0
    %613 = vmatpush.msra.mxu0 0.0
    %v614 = vand.u32 %v95, 4294901760
    %v615 = vsub.f32 %v95, %v614
    %616 = vmatpush.msra.mxu0 %v615
    %v617 = vand.u32 %v94, 4294901760
    %v618 = vsub.f32 %v94, %v617
    %619 = vmatpush.msra.mxu0 %v618
    %v620 = vand.u32 %v93, 4294901760
    %v621 = vsub.f32 %v93, %v620
    %622 = vmatpush.msra.mxu0 %v621
    %v623 = vand.u32 %v92, 4294901760
    %v624 = vsub.f32 %v92, %v623
    %625 = vmatpush.msra.mxu0 %v624
    %v626 = vand.u32 %v91, 4294901760
    %v627 = vsub.f32 %v91, %v626
    %628 = vmatpush.msra.mxu0 %v627
    %v629 = vand.u32 %v90, 4294901760
    %v630 = vsub.f32 %v90, %v629
    %631 = vmatpush.msra.mxu0 %v630
    %v632 = vand.u32 %v89, 4294901760
    %v633 = vsub.f32 %v89, %v632
    %634 = vmatpush.msra.mxu0 %v633
    %v635 = vand.u32 %v88, 4294901760
    %v636 = vsub.f32 %v88, %v635
    %637 = vmatpush.msra.mxu0 %v636
    %v638 = vand.u32 %v87, 4294901760
    %v639 = vsub.f32 %v87, %v638
    %640 = vmatpush.msra.mxu0 %v639
    %v641 = vand.u32 %v86, 4294901760
    %v642 = vsub.f32 %v86, %v641
    %643 = vmatpush.msra.mxu0 %v642
    %v644 = vand.u32 %v85, 4294901760
    %v645 = vsub.f32 %v85, %v644
    %646 = vmatpush.msra.mxu0 %v645
    %v647 = vand.u32 %v84, 4294901760
    %v648 = vsub.f32 %v84, %v647
    %649 = vmatpush.msra.mxu0 %v648
    %v650 = vand.u32 %v83, 4294901760
    %v651 = vsub.f32 %v83, %v650
    %652 = vmatpush.msra.mxu0 %v651
    %v653 = vand.u32 %v98, 4294901760
    %v654 = vsub.f32 %v98, %v653
    %655 = vmatmul.f32.gmra.mxu0 %v654
    %v656 = vpop.f32.mrf.mxu0
    %v657 = vadd.f32 %v605, %v656
    %v658 = vand.u32 %v101, 4294901760
    %v659 = vsub.f32 %v101, %v658
    %660 = vmatmul.f32.gmra.mxu0 %v659
    %v661 = vpop.f32.mrf.mxu0
    %v662 = vadd.f32 %v609, %v661
    %663 = vdwg.mxu0
    %664 = vmatpush.msra.mxu0 0.0
    %665 = vmatpush.msra.mxu0 0.0
    %666 = vmatpush.msra.mxu0 0.0
    %v667 = vand.u32 %v95, 4294901760
    %668 = vmatpush.msra.mxu0 %v667
    %v669 = vand.u32 %v94, 4294901760
    %670 = vmatpush.msra.mxu0 %v669
    %v671 = vand.u32 %v93, 4294901760
    %672 = vmatpush.msra.mxu0 %v671
    %v673 = vand.u32 %v92, 4294901760
    %674 = vmatpush.msra.mxu0 %v673
    %v675 = vand.u32 %v91, 4294901760
    %676 = vmatpush.msra.mxu0 %v675
    %v677 = vand.u32 %v90, 4294901760
    %678 = vmatpush.msra.mxu0 %v677
    %v679 = vand.u32 %v89, 4294901760
    %680 = vmatpush.msra.mxu0 %v679
    %v681 = vand.u32 %v88, 4294901760
    %682 = vmatpush.msra.mxu0 %v681
    %v683 = vand.u32 %v87, 4294901760
    %684 = vmatpush.msra.mxu0 %v683
    %v685 = vand.u32 %v86, 4294901760
    %686 = vmatpush.msra.mxu0 %v685
    %v687 = vand.u32 %v85, 4294901760
    %688 = vmatpush.msra.mxu0 %v687
    %v689 = vand.u32 %v84, 4294901760
    %690 = vmatpush.msra.mxu0 %v689
    %v691 = vand.u32 %v83, 4294901760
    %692 = vmatpush.msra.mxu0 %v691
    %v693 = vand.u32 %v98, 4294901760
    %v694 = vsub.f32 %v98, %v693
    %v695 = vand.u32 %v694, 4294901760
    %696 = vmatmul.f32.gmra.mxu0 %v695
    %v697 = vpop.f32.mrf.mxu0
    %v698 = vadd.f32 %v657, %v697
    %v699 = vand.u32 %v101, 4294901760
    %v700 = vsub.f32 %v101, %v699
    %v701 = vand.u32 %v700, 4294901760
    %702 = vmatmul.f32.gmra.mxu0 %v701
    %v703 = vpop.f32.mrf.mxu0
    %v704 = vadd.f32 %v662, %v703
    %705 = vdwg.mxu0
    %706 = vmatpush.msra.mxu0 0.0
    %707 = vmatpush.msra.mxu0 0.0
    %708 = vmatpush.msra.mxu0 0.0
    %v709 = vand.u32 %v95, 4294901760
    %v710 = vsub.f32 %v95, %v709
    %v711 = vand.u32 %v710, 4294901760
    %712 = vmatpush.msra.mxu0 %v711
    %v713 = vand.u32 %v94, 4294901760
    %v714 = vsub.f32 %v94, %v713
    %v715 = vand.u32 %v714, 4294901760
    %716 = vmatpush.msra.mxu0 %v715
    %v717 = vand.u32 %v93, 4294901760
    %v718 = vsub.f32 %v93, %v717
    %v719 = vand.u32 %v718, 4294901760
    %720 = vmatpush.msra.mxu0 %v719
    %v721 = vand.u32 %v92, 4294901760
    %v722 = vsub.f32 %v92, %v721
    %v723 = vand.u32 %v722, 4294901760
    %724 = vmatpush.msra.mxu0 %v723
    %v725 = vand.u32 %v91, 4294901760
    %v726 = vsub.f32 %v91, %v725
    %v727 = vand.u32 %v726, 4294901760
    %728 = vmatpush.msra.mxu0 %v727
    %v729 = vand.u32 %v90, 4294901760
    %v730 = vsub.f32 %v90, %v729
    %v731 = vand.u32 %v730, 4294901760
    %732 = vmatpush.msra.mxu0 %v731
    %v733 = vand.u32 %v89, 4294901760
    %v734 = vsub.f32 %v89, %v733
    %v735 = vand.u32 %v734, 4294901760
    %736 = vmatpush.msra.mxu0 %v735
    %v737 = vand.u32 %v88, 4294901760
    %v738 = vsub.f32 %v88, %v737
    %v739 = vand.u32 %v738, 4294901760
    %740 = vmatpush.msra.mxu0 %v739
    %v741 = vand.u32 %v87, 4294901760
    %v742 = vsub.f32 %v87, %v741
    %v743 = vand.u32 %v742, 4294901760
    %744 = vmatpush.msra.mxu0 %v743
    %v745 = vand.u32 %v86, 4294901760
    %v746 = vsub.f32 %v86, %v745
    %v747 = vand.u32 %v746, 4294901760
    %748 = vmatpush.msra.mxu0 %v747
    %v749 = vand.u32 %v85, 4294901760
    %v750 = vsub.f32 %v85, %v749
    %v751 = vand.u32 %v750, 4294901760
    %752 = vmatpush.msra.mxu0 %v751
    %v753 = vand.u32 %v84, 4294901760
    %v754 = vsub.f32 %v84, %v753
    %v755 = vand.u32 %v754, 4294901760
    %756 = vmatpush.msra.mxu0 %v755
    %v757 = vand.u32 %v83, 4294901760
    %v758 = vsub.f32 %v83, %v757
    %v759 = vand.u32 %v758, 4294901760
    %760 = vmatpush.msra.mxu0 %v759
    %v761 = vand.u32 %v98, 4294901760
    %762 = vmatmul.f32.gmra.mxu0 %v761
    %v763 = vpop.f32.mrf.mxu0
    %v764 = vadd.f32 %v698, %v763
    %v765 = vand.u32 %v101, 4294901760
    %766 = vmatmul.f32.gmra.mxu0 %v765
    %v767 = vpop.f32.mrf.mxu0
    %v768 = vadd.f32 %v704, %v767
    %769 = vdwg.mxu0
    %770 = vmatpush.msra.mxu0 0.0
    %771 = vmatpush.msra.mxu0 0.0
    %772 = vmatpush.msra.mxu0 0.0
    %v773 = vand.u32 %v95, 4294901760
    %774 = vmatpush.msra.mxu0 %v773
    %v775 = vand.u32 %v94, 4294901760
    %776 = vmatpush.msra.mxu0 %v775
    %v777 = vand.u32 %v93, 4294901760
    %778 = vmatpush.msra.mxu0 %v777
    %v779 = vand.u32 %v92, 4294901760
    %780 = vmatpush.msra.mxu0 %v779
    %v781 = vand.u32 %v91, 4294901760
    %782 = vmatpush.msra.mxu0 %v781
    %v783 = vand.u32 %v90, 4294901760
    %784 = vmatpush.msra.mxu0 %v783
    %v785 = vand.u32 %v89, 4294901760
    %786 = vmatpush.msra.mxu0 %v785
    %v787 = vand.u32 %v88, 4294901760
    %788 = vmatpush.msra.mxu0 %v787
    %v789 = vand.u32 %v87, 4294901760
    %790 = vmatpush.msra.mxu0 %v789
    %v791 = vand.u32 %v86, 4294901760
    %792 = vmatpush.msra.mxu0 %v791
    %v793 = vand.u32 %v85, 4294901760
    %794 = vmatpush.msra.mxu0 %v793
    %v795 = vand.u32 %v84, 4294901760
    %796 = vmatpush.msra.mxu0 %v795
    %v797 = vand.u32 %v83, 4294901760
    %798 = vmatpush.msra.mxu0 %v797
    %v799 = vand.u32 %v98, 4294901760
    %800 = vmatmul.f32.gmra.mxu0 %v799
    %v801 = vpop.f32.mrf.mxu0
    %v802 = vadd.f32 %v764, %v801
    %v803 = vand.u32 %v101, 4294901760
    %804 = vmatmul.f32.gmra.mxu0 %v803
    %v805 = vpop.f32.mrf.mxu0
    %v806 = vadd.f32 %v768, %v805
    %807 = vdwg.mxu0
    %808 = vst [vmem:[#allocation5] sm:$0xff] %v802
    %809 = vst [vmem:[#allocation5 + $0x8] sm:$0xff] %v806
    // Predicated region
    $region14: #{tpu_custom_call.1} parent=1 // pred_check
      _
    $region15: #{tpu_custom_call.1} parent=1 // pred_check_branch
      %811 = sbr.rel (0) target = $region17
    $region16: #{tpu_custom_call.1} parent=1 // pred_region
      %813 = vsyncadd [#allocation4], 0
      %s814 = sshll.u32 [#allocation5], 4
      %s815 = int_to_ptr.vmem [resolvable:$true] %s814
      %s816 = sshll.u32 %s2, 4
      %s817 = int_to_ptr.hbm [resolvable:$true] %s816
      %822 = dma.vmem_to_hbm [thread:$0]  %s815, 256, %s817, [#allocation4], 128, 128, 8
    $region17: #{tpu_custom_call.1} parent=1 // pred_fallthru
      _
    // Predicated region
    $region18: #{tpu_custom_call.1} parent=1 // pred_check
      _
    $region19: #{tpu_custom_call.1} parent=1 // pred_check_branch
      %824 = sbr.rel (0) target = $region21
    $region20: #{tpu_custom_call.1} parent=1 // pred_region
      %826 = dma.done [#allocation4], 256
    $region21: #{tpu_custom_call.1} parent=1 // pred_fallthru
      _
    %827 = vsyncpa [#allocation3], 1
    %828 = vsyncpa [#allocation4], 1

</llo_original>
